<compile_context>
chip_gen: v7x
topology: tpu7x:2x2x1
jax: 0.10.0
libtpu: 0.0.40
codegen_flags: <defaults>
</compile_context>

<pallas_src>
import functools

import jax
import jax.numpy as jnp
from jax.experimental import pallas as pl
from jax.experimental.pallas import tpu as pltpu


# ----------------------------------------------------------------------------
# Helpers
# ----------------------------------------------------------------------------
def _round_up(x, m):
    return ((x + m - 1) // m) * m


def _adaptive_pool_matrix(in_len, out_len, dtype=jnp.float32):
    """Pooling matrix P (out_len, in_len) matching F.adaptive_avg_pool1d."""
    i = jnp.arange(out_len)
    starts = (i * in_len) // out_len                     # floor(i*T/L)
    ends = -((-(i + 1) * in_len) // out_len)             # ceil((i+1)*T/L)
    t = jnp.arange(in_len)
    sel = (t[None, :] >= starts[:, None]) & (t[None, :] < ends[:, None])
    counts = (ends - starts).astype(dtype)
    return sel.astype(dtype) / counts[:, None]


def _device_traits():
    """(vmem_capacity_bytes, mxu_rows, multi_tensorcore) with safe fallbacks."""
    try:
        vmem_cap = int(pltpu.get_tpu_info().vmem_capacity_bytes)
    except Exception:
        vmem_cap = 64 * 1024 * 1024          # conservative: v7x per-TC VMEM
    kind = ""
    try:
        kind = jax.devices()[0].device_kind.lower()
    except Exception:
        pass
    small_mxu = any(t in kind for t in ("v2", "v3", "v4", "v5 lite", "v5lite", "v5e"))
    mxu_rows = 128 if small_mxu else 256     # native MXU M-tile (v5e=128, v6e/v7x=256)
    multi_tc = "7x" in kind                  # v7x: "parallel" grid axis feeds 2 TCs
    return vmem_cap, mxu_rows, multi_tc


def _vmem_estimate(d, T, C, L, Lp, F_pad, itemsize):
    """Honest per-grid-step VMEM estimate for a block of d batches."""
    xblk = T * d * C * itemsize              # x block
    oblk = L * d * F_pad * itemsize          # output block
    keep = T * d * 4                         # keep mask block (f32)
    consts = (L * T + C * F_pad) * itemsize + F_pad * 4      # pool + W + bias
    acc = d * Lp * C * itemsize              # scratch (single-buffered)
    inter = (2 * T * d * C + L * d * C + Lp * d * F_pad) * 4  # f32 temporaries
    return 2 * (xblk + oblk + keep + consts) + acc + inter    # 2x = double buffer


def _choose_block_batch(B, T, C, L, Lp, F_pad, itemsize,
                        vmem_cap, mxu_rows, multi_tc):
    """Batches per grid step.

    Constraints: d divides B; the (T, d*C) x-block obeys the (8,128) lane rule
    (d == B or d*C % 128 == 0); the estimated VMEM stays within ~45% of the
    device capacity.  Preferences: reach the MXU row target d*L >= mxu_rows;
    on v7x keep an even number of grid steps (>=4 if possible) for the two
    TensorCores; on single-TC chips take the largest fitting block (>=2 steps
    if possible so the x DMA can be hidden)."""
    budget = int(0.45 * vmem_cap)
    cands = [d for d in range(1, B + 1)
             if B % d == 0 and (d == B or (d * C) % 128 == 0)]
    fits = [d for d in cands
            if _vmem_estimate(d, T, C, L, Lp, F_pad, itemsize) <= budget]
    if not fits:
        # Nothing fits the budget: take the smallest legal block and rely on the
        # explicit vmem_limit_bytes (capped at device capacity) set by the wrapper.
        # TODO(synk): also tile the time axis if a single batch still overflows VMEM.
        fits = [min(cands)]
    good = [d for d in fits if d * L >= mxu_rows] or fits
    if multi_tc:
        four = [d for d in good if (B // d) >= 4 and (B // d) % 2 == 0]
        two = [d for d in good if (B // d) >= 2 and (B // d) % 2 == 0]
        return max(four or two or good)
    multi_step = [d for d in good if B // d >= 2]
    return max(multi_step) if multi_step else max(good)


# ----------------------------------------------------------------------------
# Pallas kernels
# ----------------------------------------------------------------------------
def _avg_pool_proj_mask_kernel(x_ref, keep_ref, pool_ref, w_ref, b_ref,
                               o_ref, acc_ref, *, bb, c, l, lp, f):
    """Masked variant.
    x_ref: (T, Bb*C)   keep_ref: (T, Bb) f32   pool_ref: (L, T) x-dtype
    w_ref: (C, F_pad)  b_ref: (1, F_pad) f32   o_ref: (L, Bb*F_pad)
    acc_ref: VMEM (Bb*Lp, C) scratch in x dtype.
    """
    t = keep_ref.shape[0]
    # Lane-broadcast keep (T, Bb) -> (T, Bb*C): per-batch (T,1)->(T,C) broadcast
    # + lane concat (pure vreg regrouping when C % 128 == 0).
    keepb = jnp.concatenate(
        [jnp.broadcast_to(keep_ref[:, b:b + 1], (t, c)) for b in range(bb)],
        axis=1)                                              # (T, Bb*C) f32
    xm = (x_ref[...].astype(jnp.float32) * keepb).astype(x_ref.dtype)

    # ONE pooling matmul over all Bb batches (N = Bb*C lanes).
    pooled = jnp.dot(pool_ref[...], xm,
                     preferred_element_type=jnp.float32)     # (L, Bb*C) f32

    # Restack (L, Bb*C) lane slabs -> sublane-aligned (Bb*Lp, C) rows in VMEM.
    for b in range(bb):
        acc_ref[b * lp:b * lp + l, :] = (
            pooled[:, b * c:(b + 1) * c].astype(acc_ref.dtype))

    # ONE projection matmul with M = Bb*Lp rows, f32 accumulation + bias.
    proj = jnp.dot(acc_ref[...], w_ref[...],
                   preferred_element_type=jnp.float32) + b_ref[...]

    # Lane-dense output: Bb contiguous (L, F_pad) slabs (F_pad % 128 == 0).
    for b in range(bb):
        o_ref[:, b * f:(b + 1) * f] = proj[b * lp:b * lp + l, :].astype(o_ref.dtype)


def _avg_pool_proj_nomask_kernel(x_ref, pool_ref, w_ref, b_ref,
                                 o_ref, acc_ref, *, bb, c, l, lp, f):
    """Mask-free variant: no keep input, no mask multiply."""
    pooled = jnp.dot(pool_ref[...], x_ref[...],
                     preferred_element_type=jnp.float32)     # (L, Bb*C) f32
    for b in range(bb):
        acc_ref[b * lp:b * lp + l, :] = (
            pooled[:, b * c:(b + 1) * c].astype(acc_ref.dtype))
    proj = jnp.dot(acc_ref[...], w_ref[...],
                   preferred_element_type=jnp.float32) + b_ref[...]
    for b in range(bb):
        o_ref[:, b * f:(b + 1) * f] = proj[b * lp:b * lp + l, :].astype(o_ref.dtype)


# ----------------------------------------------------------------------------
# Wrapper
# ----------------------------------------------------------------------------
@functools.partial(jax.jit, static_argnames=("dest_len", "tbc"))
def average_pooler(x, weight, bias, dest_len, pad_mask=None, tbc=True):
    """x: (T, B, C) if tbc else (B, T, C); weight: (F, C); bias: (F,)."""
    if not tbc:
        x = jnp.transpose(x, (1, 0, 2))                      # -> (T, B, C)
    T, B, C = x.shape
    F_out = weight.shape[0]
    L = int(dest_len)
    Lp = _round_up(L, 8)                                     # aligned acc rows
    F_pad = _round_up(F_out, 128)                            # lane-dense stores

    vmem_cap, mxu_rows, multi_tc = _device_traits()
    itemsize = x.dtype.itemsize
    Bb = _choose_block_batch(B, T, C, L, Lp, F_pad, itemsize,
                             vmem_cap, mxu_rows, multi_tc)
    G = B // Bb

    # Explicit scoped-VMEM limit (default is only 16-32 MiB depending on chip).
    est = _vmem_estimate(Bb, T, C, L, Lp, F_pad, itemsize)
    vmem_limit = max(32 << 20, min(int(0.9 * vmem_cap), est + (16 << 20)))

    # ---- operands (all wrapper-side ops are tiny / metadata-only) -----------
    x2d = x.reshape(T, B * C)                                # free row-major reshape
    pool = _adaptive_pool_matrix(T, L, jnp.float32).astype(x.dtype)   # (L, T)
    w_t = weight.T.astype(x.dtype)                           # (C, F) MXU operand
    b_vec = bias.astype(jnp.float32)
    if F_pad != F_out:
        w_t = jnp.pad(w_t, ((0, 0), (0, F_pad - F_out)))
        b_vec = jnp.pad(b_vec, (0, F_pad - F_out))
    b2d = b_vec.reshape(1, F_pad)

    # ---- specs ---------------------------------------------------------------
    const2 = lambda g: (0, 0)
    x_spec = pl.BlockSpec((T, Bb * C), lambda g: (0, g))
    out_spec = pl.BlockSpec((L, Bb * F_pad), lambda g: (0, g))
    pool_spec = pl.BlockSpec((L, T), const2)
    w_spec = pl.BlockSpec((C, F_pad), const2)
    b_spec = pl.BlockSpec((1, F_pad), const2)
    scratch = [pltpu.VMEM((Bb * Lp, C), x.dtype)]
    out_shape = jax.ShapeDtypeStruct((L, B * F_pad), x.dtype)
    cparams = pltpu.CompilerParams(dimension_semantics=("parallel",),
                                   vmem_limit_bytes=int(vmem_limit))

    if pad_mask is None:
        kern = functools.partial(_avg_pool_proj_nomask_kernel,
                                 bb=Bb, c=C, l=L, lp=Lp, f=F_pad)
        out2d = pl.pallas_call(
            kern,
            out_shape=out_shape,
            grid_spec=pltpu.PrefetchScalarGridSpec(
                num_scalar_prefetch=0,
                grid=(G,),
                in_specs=[x_spec, pool_spec, w_spec, b_spec],
                out_specs=out_spec,
                scratch_shapes=scratch),
            compiler_params=cparams,
        )(x2d, pool, w_t, b2d)
    else:
        keep = 1.0 - pad_mask.astype(jnp.float32)            # (B, T)
        keep3 = keep.reshape(G, Bb, T).transpose(0, 2, 1)    # (G, T, Bb), tiny
        keep_spec = pl.BlockSpec((None, T, Bb), lambda g: (g, 0, 0))
        kern = functools.partial(_avg_pool_proj_mask_kernel,
                                 bb=Bb, c=C, l=L, lp=Lp, f=F_pad)
        out2d = pl.pallas_call(
            kern,
            out_shape=out_shape,
            grid_spec=pltpu.PrefetchScalarGridSpec(
                num_scalar_prefetch=0,
                grid=(G,),
                in_specs=[x_spec, keep_spec, pool_spec, w_spec, b_spec],
                out_specs=out_spec,
                scratch_shapes=scratch),
            compiler_params=cparams,
        )(x2d, keep3, pool, w_t, b2d)

    out = out2d.reshape(L, B, F_pad)                         # free reshape
    if F_pad != F_out:
        out = out[:, :, :F_out]                              # drop lane padding
    if not tbc:
        out = jnp.transpose(out, (1, 0, 2))                  # -> (B, L, F)
    return out


# ----------------------------------------------------------------------------
# Pure-JAX reference (mirrors the PyTorch module exactly)
# ----------------------------------------------------------------------------
def average_pooler_ref(x, weight, bias, dest_len, pad_mask=None, tbc=True):
    if tbc:
        x = jnp.transpose(x, (1, 0, 2))
    if pad_mask is not None:
        x = jnp.where(pad_mask[..., None], 0.0, x)
    pool = _adaptive_pool_matrix(x.shape[1], dest_len, dtype=x.dtype)
    x = jnp.einsum("lt,btc->blc", pool, x)
    x = x @ weight.T + bias
    if tbc:
        x = jnp.transpose(x, (1, 0, 2))
    return x


if __name__ == "__main__":
    key = jax.random.PRNGKey(0)

    def run_case(T, B, C, F_out, dest_len, with_mask, k):
        kx, kw, kb = jax.random.split(k, 3)
        x = jax.random.normal(kx, (T, B, C), dtype=jnp.float32)      # tbc layout
        weight = jax.random.normal(kw, (F_out, C), dtype=jnp.float32) * 0.05
        bias = jax.random.normal(kb, (F_out,), dtype=jnp.float32) * 0.05
        pad_mask = None
        if with_mask:
            pad_mask = jnp.zeros((B, T), dtype=bool)
            pad_mask = pad_mask.at[B - 1, T - 2:].set(True)          # tail padding
            pad_mask = pad_mask.at[0, :1].set(True)                  # head padding
        out = jax.block_until_ready(
            average_pooler(x, weight, bias, dest_len, pad_mask=pad_mask, tbc=True))
        ref = average_pooler_ref(x, weight, bias, dest_len,
                                 pad_mask=pad_mask, tbc=True)
        assert out.shape == (dest_len, B, F_out), out.shape
        assert jnp.allclose(out, ref, atol=1e-4, rtol=1e-4), (
            f"mismatch T={T} B={B} C={C} F={F_out} L={dest_len} mask={with_mask}: "
            f"max abs err {jnp.max(jnp.abs(out - ref))}")

    k0, k1, k2 = jax.random.split(key, 3)
    # tiny config: non-divisible pooling windows, F < 128 -> exercises F padding
    run_case(T=8, B=2, C=32, F_out=16, dest_len=5, with_mask=True, k=k0)
    # same config, mask-free kernel variant (no keep input, no multiply)
    run_case(T=8, B=2, C=32, F_out=16, dest_len=5, with_mask=False, k=k1)
    # lane-aligned config (C, F multiples of 128) with multiple batch groups
    run_case(T=16, B=4, C=128, F_out=256, dest_len=7, with_mask=True, k=k2)

    print("KERNEL_OK")
</pallas_src>

<mosaic_0001>
module attributes {stable_mosaic.version = 11 : i64} {
  func.func @_avg_pool_proj_mask_kernel(%arg0: i32, %arg1: memref<8x64xf32, #tpu.memory_space<vmem>>, %arg2: memref<1x8x2xf32, #tpu.memory_space<vmem>>, %arg3: memref<5x8xf32, #tpu.memory_space<vmem>>, %arg4: memref<32x128xf32, #tpu.memory_space<vmem>>, %arg5: memref<1x128xf32, #tpu.memory_space<vmem>>, %arg6: memref<5x256xf32, #tpu.memory_space<vmem>>, %arg7: memref<16x32xf32, #tpu.memory_space<vmem>>) attributes {dimension_semantics = [#tpu.dimension_semantics<parallel>], iteration_bounds = array<i64: 1>, scalar_prefetch = 0 : i64, scratch_operands = 1 : i64, tpu.core_type = #tpu.core_type<tc>, window_params = [{transform_indices = @transform_0, window_bounds = array<i64: 8, 64>}, {transform_indices = @transform_1, window_bounds = array<i64: 1, 8, 2>}, {pipeline_mode = #tpu.pipeline_mode<synchronous>, transform_indices = @transform_2, window_bounds = array<i64: 5, 8>}, {pipeline_mode = #tpu.pipeline_mode<synchronous>, transform_indices = @transform_3, window_bounds = array<i64: 32, 128>}, {pipeline_mode = #tpu.pipeline_mode<synchronous>, transform_indices = @transform_4, window_bounds = array<i64: 1, 128>}, {transform_indices = @transform_5, window_bounds = array<i64: 5, 256>}]} {
    %c0 = arith.constant 0 : index
    %c0_0 = arith.constant 0 : index
    %c0_1 = arith.constant 0 : index
    %0 = vector.load %arg2[%c0, %c0_0, %c0_1] : memref<1x8x2xf32, #tpu.memory_space<vmem>>, vector<1x8x1xf32>
    %1 = vector.shape_cast %0 : vector<1x8x1xf32> to vector<8x1xf32>
    %2 = vector.shape_cast %1 : vector<8x1xf32> to vector<8x1xf32>
    %3 = vector.broadcast %2 : vector<8x1xf32> to vector<8x32xf32>
    %c0_2 = arith.constant 0 : index
    %c0_3 = arith.constant 0 : index
    %c1 = arith.constant 1 : index
    %4 = vector.load %arg2[%c0_2, %c0_3, %c1] : memref<1x8x2xf32, #tpu.memory_space<vmem>>, vector<1x8x1xf32>
    %5 = vector.shape_cast %4 : vector<1x8x1xf32> to vector<8x1xf32>
    %6 = vector.shape_cast %5 : vector<8x1xf32> to vector<8x1xf32>
    %7 = vector.broadcast %6 : vector<8x1xf32> to vector<8x32xf32>
    %8 = tpu.concatenate %3, %7 in 1 : vector<8x32xf32>, vector<8x32xf32> -> vector<8x64xf32>
    %c0_4 = arith.constant 0 : index
    %c0_5 = arith.constant 0 : index
    %9 = vector.load %arg1[%c0_4, %c0_5] : memref<8x64xf32, #tpu.memory_space<vmem>>, vector<8x64xf32>
    %10 = arith.mulf %9, %8 : vector<8x64xf32>
    %c0_6 = arith.constant 0 : index
    %c0_7 = arith.constant 0 : index
    %11 = vector.load %arg3[%c0_6, %c0_7] : memref<5x8xf32, #tpu.memory_space<vmem>>, vector<5x8xf32>
    %cst = arith.constant dense<0.000000e+00> : vector<5x64xf32>
    %12 = tpu.matmul %11, %10, %cst {dimension_numbers = #tpu.dot_dimension_numbers<[1], [0], [0], [1], [0, 0, 1, 1], [], []>} : vector<5x8xf32>, vector<8x64xf32>, vector<5x64xf32> -> vector<5x64xf32>
    %13 = vector.extract_strided_slice %12 {offsets = [0, 0], sizes = [5, 32], strides = [1, 1]} : vector<5x64xf32> to vector<5x32xf32>
    %c0_8 = arith.constant 0 : index
    %c0_9 = arith.constant 0 : index
    %14 = vector.load %arg7[%c0_8, %c0_9] : memref<16x32xf32, #tpu.memory_space<vmem>>, vector<5x32xf32>
    tpu.vector_store %arg7[%c0_8, %c0_9], %13 {strides = array<i32>} : memref<16x32xf32, #tpu.memory_space<vmem>>, vector<5x32xf32>,
    %15 = vector.extract_strided_slice %12 {offsets = [0, 32], sizes = [5, 32], strides = [1, 1]} : vector<5x64xf32> to vector<5x32xf32>
    %c8 = arith.constant 8 : index
    %c0_10 = arith.constant 0 : index
    %16 = vector.load %arg7[%c8, %c0_10] : memref<16x32xf32, #tpu.memory_space<vmem>>, vector<5x32xf32>
    tpu.vector_store %arg7[%c8, %c0_10], %15 {strides = array<i32>} : memref<16x32xf32, #tpu.memory_space<vmem>>, vector<5x32xf32>,
    %c0_11 = arith.constant 0 : index
    %c0_12 = arith.constant 0 : index
    %17 = vector.load %arg7[%c0_11, %c0_12] : memref<16x32xf32, #tpu.memory_space<vmem>>, vector<16x32xf32>
    %c0_13 = arith.constant 0 : index
    %c0_14 = arith.constant 0 : index
    %18 = vector.load %arg4[%c0_13, %c0_14] : memref<32x128xf32, #tpu.memory_space<vmem>>, vector<32x128xf32>
    %cst_15 = arith.constant dense<0.000000e+00> : vector<16x128xf32>
    %19 = tpu.matmul %17, %18, %cst_15 {dimension_numbers = #tpu.dot_dimension_numbers<[1], [0], [0], [1], [0, 0, 1, 1], [], []>} : vector<16x32xf32>, vector<32x128xf32>, vector<16x128xf32> -> vector<16x128xf32>
    %c0_16 = arith.constant 0 : index
    %c0_17 = arith.constant 0 : index
    %20 = vector.load %arg5[%c0_16, %c0_17] : memref<1x128xf32, #tpu.memory_space<vmem>>, vector<1x128xf32>
    %21 = vector.broadcast %20 : vector<1x128xf32> to vector<16x128xf32>
    %22 = arith.addf %19, %21 : vector<16x128xf32>
    %23 = vector.extract_strided_slice %22 {offsets = [0, 0], sizes = [5, 128], strides = [1, 1]} : vector<16x128xf32> to vector<5x128xf32>
    %c0_18 = arith.constant 0 : index
    %c0_19 = arith.constant 0 : index
    %24 = vector.load %arg6[%c0_18, %c0_19] : memref<5x256xf32, #tpu.memory_space<vmem>>, vector<5x128xf32>
    tpu.vector_store %arg6[%c0_18, %c0_19], %23 {strides = array<i32>} : memref<5x256xf32, #tpu.memory_space<vmem>>, vector<5x128xf32>,
    %25 = vector.extract_strided_slice %22 {offsets = [8, 0], sizes = [5, 128], strides = [1, 1]} : vector<16x128xf32> to vector<5x128xf32>
    %c0_20 = arith.constant 0 : index
    %c128 = arith.constant 128 : index
    %26 = vector.load %arg6[%c0_20, %c128] : memref<5x256xf32, #tpu.memory_space<vmem>>, vector<5x128xf32>
    tpu.vector_store %arg6[%c0_20, %c128], %25 {strides = array<i32>} : memref<5x256xf32, #tpu.memory_space<vmem>>, vector<5x128xf32>,
    return
  }
  func.func @transform_0(%arg0: i32) -> (i32, i32) {
    %c0_i32 = arith.constant 0 : i32
    %c0_i32_0 = arith.constant 0 : i32
    return %c0_i32, %arg0 : i32, i32
  }
  func.func @transform_1(%arg0: i32) -> (i32, i32, i32) {
    %c0_i32 = arith.constant 0 : i32
    %c0_i32_0 = arith.constant 0 : i32
    %c0_i32_1 = arith.constant 0 : i32
    return %arg0, %c0_i32, %c0_i32_0 : i32, i32, i32
  }
  func.func @transform_2(%arg0: i32) -> (i32, i32) {
    %c0_i32 = arith.constant 0 : i32
    %c0_i32_0 = arith.constant 0 : i32
    %c0_i32_1 = arith.constant 0 : i32
    return %c0_i32, %c0_i32_0 : i32, i32
  }
  func.func @transform_3(%arg0: i32) -> (i32, i32) {
    %c0_i32 = arith.constant 0 : i32
    %c0_i32_0 = arith.constant 0 : i32
    %c0_i32_1 = arith.constant 0 : i32
    return %c0_i32, %c0_i32_0 : i32, i32
  }
  func.func @transform_4(%arg0: i32) -> (i32, i32) {
    %c0_i32 = arith.constant 0 : i32
    %c0_i32_0 = arith.constant 0 : i32
    %c0_i32_1 = arith.constant 0 : i32
    return %c0_i32, %c0_i32_0 : i32, i32
  }
  func.func @transform_5(%arg0: i32) -> (i32, i32) {
    %c0_i32 = arith.constant 0 : i32
    %c0_i32_0 = arith.constant 0 : i32
    return %c0_i32, %arg0 : i32, i32
  }
}

</mosaic_0001>

<llo_original>
// kernel: average_pooler.1
$region0: #{average_pooler.1}
  #allocation0 [shape = 'u32[]', space=smem, size = 0x4, offset = 0x4, fixed_abs, tag = 'smem constant byte address 0x4 - core index']
  #allocation1 [shape = 'u32[144,128]{1,0:T(1,128)}', space=vmem, size = 0x12000, scoped, tag = 'internal scratch']
  #allocation2 [shape = 'f32[16,32]{1,0:T(8,128)}', space=vmem, size = 0x2000, scoped, tag = 'scratch operand']
  %s0 = inlined_call_operand.vmem [shape: f32[8,64], index: 0, kind: input, shape index: {}]
  %s1 = inlined_call_operand.vmem [shape: f32[1,8,2], index: 1, kind: input, shape index: {}]
  %s2 = inlined_call_operand.vmem [shape: f32[5,8], index: 2, kind: input, shape index: {}]
  %s3 = inlined_call_operand.vmem [shape: f32[32,128], index: 3, kind: input, shape index: {}]
  %s4 = inlined_call_operand.vmem [shape: f32[1,128], index: 4, kind: input, shape index: {}]
  %s5 = inlined_call_operand.vmem [shape: f32[5,256], index: 5, kind: output, shape index: {}]
  %s6 = sld [smem:[#allocation0]]
  $region30: #{average_pooler.1} parent=0
    _
  %s8 = ssub.s32 1, %s6
  %s9 = scalar_select 0, %s8, %s6
  // Predicated region
  $region2: #{average_pooler.1} parent=0 // pred_check
    _
  $region3: #{average_pooler.1} parent=0 // pred_check_branch
    %11 = sbr.rel (0) target = $region5
  $region4: #{average_pooler.1} parent=0 // pred_region
    _
  $region5: #{average_pooler.1} parent=0 // pred_fallthru
    _
  // Predicated region
  $region6: #{average_pooler.1} parent=0 // pred_check
    _
  $region7: #{average_pooler.1} parent=0 // pred_check_branch
    %13 = sbr.rel (0) target = $region9
  $region8: #{average_pooler.1} parent=0 // pred_region
    _
  $region9: #{average_pooler.1} parent=0 // pred_fallthru
    _
  // Predicated region
  $region10: #{average_pooler.1} parent=0 // pred_check
    _
  $region11: #{average_pooler.1} parent=0 // pred_check_branch
    %15 = sbr.rel (0) target = $region13
  $region12: #{average_pooler.1} parent=0 // pred_region
    _
  $region13: #{average_pooler.1} parent=0 // pred_fallthru
    _
  // Predicated region
  $region14: #{average_pooler.1} parent=0 // pred_check
    _
  $region15: #{average_pooler.1} parent=0 // pred_check_branch
    %17 = sbr.rel (0) target = $region17
  $region16: #{average_pooler.1} parent=0 // pred_region
    _
  $region17: #{average_pooler.1} parent=0 // pred_fallthru
    _
  // Predicated region
  $region18: #{average_pooler.1} parent=0 // pred_check
    _
  $region19: #{average_pooler.1} parent=0 // pred_check_branch
    %19 = sbr.rel (0) target = $region21
  $region20: #{average_pooler.1} parent=0 // pred_region
    _
  $region21: #{average_pooler.1} parent=0 // pred_fallthru
    _
  %v20 = vld [vmem:[%s1] sm:$0xff]
  %22 = vset.pattern.permute.xlu0 0
  %23 = vperm.xlu0 %22, %v20
  %v24 = vpop.permute.xlu0 %23
  %26 = vset.pattern.permute.xlu0 1
  %27 = vperm.xlu0 %26, %v20
  %v28 = vpop.permute.xlu0 %27
  %vm30 = vcmask 261120
  %v31 = vsel %vm30, %v24, %v28
  %v32 = vld [vmem:[%s0] sm:$0xff]
  %v33 = vmul.f32 %v32, %v31
  %v34 = vld [vmem:[%s2] sm:$0x1f]
  %vm35 = vcmask 64512
  %v37 = vsel %vm35, %v34, 0
  %39 = vmatprep.subr.mxu0 0.0
  %40 = vmatpush1.msra.mxu0 %v33
  %41 = vmatprep.subr.mxu0 0.0
  %42 = vmatpush1.msra.mxu0 0.0
  %43 = vmatprep.subr.mxu0 0.0
  %44 = vmatpush1.msra.mxu0 0.0
  %45 = vmatprep.subr.mxu0 0.0
  %46 = vmatpush1.msra.mxu0 0.0
  %47 = vmatprep.subr.mxu0 0.0
  %48 = vmatpush1.msra.mxu0 0.0
  %49 = vmatprep.subr.mxu0 0.0
  %50 = vmatpush1.msra.mxu0 0.0
  %51 = vmatprep.subr.mxu0 0.0
  %52 = vmatpush1.msra.mxu0 0.0
  %53 = vmatprep.subr.mxu0 0.0
  %54 = vmatpush1.msra.mxu0 0.0
  %55 = vmatprep.subr.mxu0 0.0
  %56 = vmatpush1.msra.mxu0 0.0
  %57 = vmatprep.subr.mxu0 0.0
  %58 = vmatpush1.msra.mxu0 0.0
  %59 = vmatprep.subr.mxu0 0.0
  %60 = vmatpush1.msra.mxu0 0.0
  %61 = vmatprep.subr.mxu0 0.0
  %62 = vmatpush1.msra.mxu0 0.0
  %63 = vmatprep.subr.mxu0 0.0
  %64 = vmatpush1.msra.mxu0 0.0
  %65 = vmatprep.subr.mxu0 0.0
  %66 = vmatpush1.msra.mxu0 0.0
  %67 = vmatprep.subr.mxu0 0.0
  %68 = vmatpush1.msra.mxu0 0.0
  %69 = vmatprep.subr.mxu0 0.0
  %70 = vmatpush1.msra.mxu0 0.0
  %71 = vmatprep.subr.mxu0 0.0
  %72 = vmatpush1.msra.mxu0 0.0
  %73 = vmatprep.subr.mxu0 0.0
  %74 = vmatpush1.msra.mxu0 0.0
  %75 = vmatprep.subr.mxu0 0.0
  %76 = vmatpush1.msra.mxu0 0.0
  %77 = vmatprep.subr.mxu0 0.0
  %78 = vmatpush1.msra.mxu0 0.0
  %79 = vmatprep.subr.mxu0 0.0
  %80 = vmatpush1.msra.mxu0 0.0
  %81 = vmatprep.subr.mxu0 0.0
  %82 = vmatpush1.msra.mxu0 0.0
  %83 = vmatprep.subr.mxu0 0.0
  %84 = vmatpush1.msra.mxu0 0.0
  %85 = vmatprep.subr.mxu0 0.0
  %86 = vmatpush1.msra.mxu0 0.0
  %87 = vmatprep.subr.mxu0 0.0
  %88 = vmatpush1.msra.mxu0 0.0
  %89 = vmatprep.subr.mxu0 0.0
  %90 = vmatpush1.msra.mxu0 0.0
  %91 = vmatprep.subr.mxu0 0.0
  %92 = vmatpush1.msra.mxu0 0.0
  %93 = vmatprep.subr.mxu0 0.0
  %94 = vmatpush1.msra.mxu0 0.0
  %95 = vmatprep.subr.mxu0 0.0
  %96 = vmatpush1.msra.mxu0 0.0
  %97 = vmatprep.subr.mxu0 0.0
  %98 = vmatpush1.msra.mxu0 0.0
  %99 = vmatprep.subr.mxu0 0.0
  %100 = vmatpush1.msra.mxu0 0.0
  %101 = vmatprep.subr.mxu0 0.0
  %102 = vmatpush1.msra.mxu0 0.0
  %103 = vmatprep.mubr.f32.mxu0 0.0
  %104 = vmatmul.mubr.f32.gmra.mrb[0].mxu0 %v37
  %v105 = vpop.f32.mrb[0].mxu0
  %v106 = vadd.f32 0.0, %v105
  %v107 = vpop.f32.mrb[0].mxu0
  %108 = vdwg.mxu0
  %vm109 = vcmask 258048
  %110 = vst.msk [vmem:[#allocation2] sm:$0x1f] %vm109, %v106
  %112 = vrot.lane.b32.xlu0 %v106, 96
  %v113 = vpop.permute.xlu0 %112
  %115 = vst.msk [vmem:[#allocation2 + $0x8] sm:$0x1f] %vm109, %v113
  %v116 = vld [vmem:[#allocation2] sm:$0xff]
  %v117 = vld [vmem:[#allocation2 + $0x8] sm:$0xff]
  %v118 = vld [vmem:[%s3] sm:$0xff]
  %v119 = vld [vmem:[%s3 + $0x8] sm:$0xff]
  %v120 = vld [vmem:[%s3 + $0x10] sm:$0xff]
  %v121 = vld [vmem:[%s3 + $0x18] sm:$0xff]
  %v122 = vld [vmem:[%s4] sm:$0x1]
  %v124 = vlaneseq
  %v125 = vshrl.u32 %v124, 7
  %v126 = vsub.s32 0, %v125
  %v127 = vrot.slane %v122, %v126
  %v130 = vsel %vm30, %v116, 0
  %v133 = vsel %vm30, %v117, 0
  %135 = vmatprep.subr.mxu0 0.0
  %136 = vmatpush1.msra.mxu0 %v118
  %137 = vmatprep.subr.mxu0 0.0
  %138 = vmatpush1.msra.mxu0 %v119
  %139 = vmatprep.subr.mxu0 0.0
  %140 = vmatpush1.msra.mxu0 %v120
  %141 = vmatprep.subr.mxu0 0.0
  %142 = vmatpush1.msra.mxu0 %v121
  %143 = vmatprep.subr.mxu0 0.0
  %144 = vmatpush1.msra.mxu0 0.0
  %145 = vmatprep.subr.mxu0 0.0
  %146 = vmatpush1.msra.mxu0 0.0
  %147 = vmatprep.subr.mxu0 0.0
  %148 = vmatpush1.msra.mxu0 0.0
  %149 = vmatprep.subr.mxu0 0.0
  %150 = vmatpush1.msra.mxu0 0.0
  %151 = vmatprep.subr.mxu0 0.0
  %152 = vmatpush1.msra.mxu0 0.0
  %153 = vmatprep.subr.mxu0 0.0
  %154 = vmatpush1.msra.mxu0 0.0
  %155 = vmatprep.subr.mxu0 0.0
  %156 = vmatpush1.msra.mxu0 0.0
  %157 = vmatprep.subr.mxu0 0.0
  %158 = vmatpush1.msra.mxu0 0.0
  %159 = vmatprep.subr.mxu0 0.0
  %160 = vmatpush1.msra.mxu0 0.0
  %161 = vmatprep.subr.mxu0 0.0
  %162 = vmatpush1.msra.mxu0 0.0
  %163 = vmatprep.subr.mxu0 0.0
  %164 = vmatpush1.msra.mxu0 0.0
  %165 = vmatprep.subr.mxu0 0.0
  %166 = vmatpush1.msra.mxu0 0.0
  %167 = vmatprep.subr.mxu0 0.0
  %168 = vmatpush1.msra.mxu0 0.0
  %169 = vmatprep.subr.mxu0 0.0
  %170 = vmatpush1.msra.mxu0 0.0
  %171 = vmatprep.subr.mxu0 0.0
  %172 = vmatpush1.msra.mxu0 0.0
  %173 = vmatprep.subr.mxu0 0.0
  %174 = vmatpush1.msra.mxu0 0.0
  %175 = vmatprep.subr.mxu0 0.0
  %176 = vmatpush1.msra.mxu0 0.0
  %177 = vmatprep.subr.mxu0 0.0
  %178 = vmatpush1.msra.mxu0 0.0
  %179 = vmatprep.subr.mxu0 0.0
  %180 = vmatpush1.msra.mxu0 0.0
  %181 = vmatprep.subr.mxu0 0.0
  %182 = vmatpush1.msra.mxu0 0.0
  %183 = vmatprep.subr.mxu0 0.0
  %184 = vmatpush1.msra.mxu0 0.0
  %185 = vmatprep.subr.mxu0 0.0
  %186 = vmatpush1.msra.mxu0 0.0
  %187 = vmatprep.subr.mxu0 0.0
  %188 = vmatpush1.msra.mxu0 0.0
  %189 = vmatprep.subr.mxu0 0.0
  %190 = vmatpush1.msra.mxu0 0.0
  %191 = vmatprep.subr.mxu0 0.0
  %192 = vmatpush1.msra.mxu0 0.0
  %193 = vmatprep.subr.mxu0 0.0
  %194 = vmatpush1.msra.mxu0 0.0
  %195 = vmatprep.subr.mxu0 0.0
  %196 = vmatpush1.msra.mxu0 0.0
  %197 = vmatprep.subr.mxu0 0.0
  %198 = vmatpush1.msra.mxu0 0.0
  %199 = vmatprep.mubr.f32.mxu0 0.0
  %200 = vmatmul.mubr.f32.gmra.mrb[0].mxu0 %v130
  %v201 = vpop.f32.mrb[0].mxu0
  %v202 = vadd.f32 %v127, %v201
  %v203 = vpop.f32.mrb[0].mxu0
  %204 = vmatprep.mubr.f32.mxu0 0.0
  %205 = vmatmul.mubr.f32.gmra.mrb[0].mxu0 %v133
  %v206 = vpop.f32.mrb[0].mxu0
  %v207 = vadd.f32 %v127, %v206
  %v208 = vpop.f32.mrb[0].mxu0
  %209 = vdwg.mxu0
  %210 = vst [vmem:[%s5] sm:$0x1f] %v202
  %211 = vst [vmem:[%s5 + $0x8] sm:$0x1f] %v207
  // Predicated region
  $region22: #{average_pooler.1} parent=0 // pred_check
    _
  $region23: #{average_pooler.1} parent=0 // pred_check_branch
    %213 = sbr.rel (0) target = $region25
  $region24: #{average_pooler.1} parent=0 // pred_region
    _
  $region25: #{average_pooler.1} parent=0 // pred_fallthru
    _
  // Predicated region
  $region26: #{average_pooler.1} parent=0 // pred_check
    _
  $region27: #{average_pooler.1} parent=0 // pred_check_branch
    %215 = sbr.rel (0) target = $region29
  $region28: #{average_pooler.1} parent=0 // pred_region
    _
  $region29: #{average_pooler.1} parent=0 // pred_fallthru
    _

</llo_original>
